<compile_context>
chip_gen: v7x
topology: tpu7x:2x2x1
jax: 0.10.0
libtpu: 0.0.40
codegen_flags: <defaults>
</compile_context>

<pallas_src>
import functools

import jax
import jax.numpy as jnp
from jax import lax
from jax.experimental import pallas as pl
from jax.experimental.pallas import tpu as pltpu


def _round_up(x, k):
    return (x + k - 1) // k * k


def _shrink(v, thr):
    # sign(v) * max(|v| - thr, 0) == max(v - thr, 0) - max(-v - thr, 0)
    return jnp.maximum(v - thr, 0.0) - jnp.maximum(-v - thr, 0.0)


def _lista_kernel(y_ref, wt_ref, bw_ref, st_ref, bs_ref, o_ref, *, T, thr):
    y = y_ref[...]                                   # (Bt, n_pad)    compute dtype
    wt = wt_ref[...]                                 # (n_pad, m_pad) compute dtype
    st = st_ref[...]                                 # (m_pad, m_pad) compute dtype
    bw = bw_ref[...]                                 # (1, m_pad)     f32
    bs = bs_ref[...]                                 # (1, m_pad)     f32

    # W(y): one MXU matmul per batch tile, reused across all T iterations.
    by = jnp.dot(y, wt, preferred_element_type=jnp.float32) + bw     # (Bt, m_pad) f32

    x = _shrink(by, thr)

    # Fold the S bias into the loop-invariant term once (hoisted broadcast).
    by_loop = by + bs

    def body(_, x):
        sx = jnp.dot(x.astype(st.dtype), st, preferred_element_type=jnp.float32)
        return _shrink(by_loop + sx, thr)

    x = lax.fori_loop(0, T, body, x, unroll=True)
    o_ref[...] = x.astype(o_ref.dtype)


def lista_forward(y, W_weight, W_bias, S_weight, S_bias, *, T, lambd, L,
                  weight_dtype=jnp.float32):
    """y: (B, n, 1) float32.  Returns x: (B, m) float32."""
    y2 = jnp.squeeze(y, axis=2)                      # (B, n) -- matches y.squeeze(2)
    B, n = y2.shape
    m = W_weight.shape[0]
    thr = float(lambd) * 0.95 / float(L)

    wbytes = jnp.dtype(weight_dtype).itemsize

    # Lane-dense padding: feature dims to multiples of 128 lanes.
    n_pad = _round_up(n, 128)
    m_pad = _round_up(m, 128)

    # Batch tile: big enough to fill MXU rows, capped by an explicit VMEM budget
    # (40 MiB working budget fits every chip, including v7x's 64 MiB VMEM).
    budget = 40 * 1024 * 1024
    resident = 2 * ((n_pad * m_pad + m_pad * m_pad) * wbytes + 2 * m_pad * 4)
    per_row = 2 * (n_pad * wbytes + m_pad * 4) + 4 * m_pad * 4   # dbl-buffered IO + f32 temps
    max_rows = max(8, (budget - resident) // max(per_row, 1))
    b_tile = max(8, min(_round_up(B, 8), 256, (max_rows // 8) * 8))
    b_pad = _round_up(B, b_tile)

    # Zero-pad operands; with thr >= 0 the padded rows/cols provably stay zero.
    y_p = jnp.zeros((b_pad, n_pad), jnp.float32).at[:B, :n].set(y2).astype(weight_dtype)
    wt_p = jnp.zeros((n_pad, m_pad), jnp.float32).at[:n, :m].set(W_weight.T).astype(weight_dtype)
    st_p = jnp.zeros((m_pad, m_pad), jnp.float32).at[:m, :m].set(S_weight.T).astype(weight_dtype)
    bw_p = jnp.zeros((1, m_pad), jnp.float32).at[0, :m].set(W_bias)
    bs_p = jnp.zeros((1, m_pad), jnp.float32).at[0, :m].set(S_bias)

    kernel = functools.partial(_lista_kernel, T=int(T), thr=thr)

    vmem_need = resident + b_tile * per_row + (4 << 20)
    vmem_limit = int(min(max(vmem_need, 16 * 1024 * 1024), 60 * 1024 * 1024))

    cost = pl.CostEstimate(
        flops=2 * b_pad * n_pad * m_pad + 2 * int(T) * b_pad * m_pad * m_pad,
        bytes_accessed=(b_pad * n_pad + n_pad * m_pad + m_pad * m_pad) * wbytes
        + (2 * m_pad + b_pad * m_pad) * 4,
        transcendentals=0,
    )

    def resident_spec(shape):
        return pl.BlockSpec(shape, lambda i: (0, 0))

    out = pl.pallas_call(
        kernel,
        out_shape=jax.ShapeDtypeStruct((b_pad, m_pad), jnp.float32),
        grid=(b_pad // b_tile,),
        in_specs=[
            pl.BlockSpec((b_tile, n_pad), lambda i: (i, 0)),
            resident_spec((n_pad, m_pad)),
            resident_spec((1, m_pad)),
            resident_spec((m_pad, m_pad)),
            resident_spec((1, m_pad)),
        ],
        out_specs=pl.BlockSpec((b_tile, m_pad), lambda i: (i, 0)),
        compiler_params=pltpu.CompilerParams(
            dimension_semantics=("parallel",),
            vmem_limit_bytes=vmem_limit,
        ),
        cost_estimate=cost,
    )(y_p, wt_p, bw_p, st_p, bs_p)

    return out[:B, :m]


def lista_reference(y, W_weight, W_bias, S_weight, S_bias, *, T, lambd, L):
    """Pure-JAX reference mirroring the PyTorch forward exactly."""
    y2 = jnp.squeeze(y, axis=2)
    thr = float(lambd) * 0.95 / float(L)

    def shrink(v):
        return jnp.sign(v) * jnp.maximum(jnp.abs(v) - thr, 0.0)

    by = y2 @ W_weight.T + W_bias
    x = shrink(by)
    for _ in range(T):
        x = shrink(by + x @ S_weight.T + S_bias)
    return x


if __name__ == "__main__":
    # Small shapes consistent with the module: n = measurement dim, m = sparse dim.
    B, n, m, T = 8, 16, 32, 5
    L = 2.0
    lambd = 0.1

    key = jax.random.PRNGKey(0)
    k_y, k_Ww, k_Wb, k_Sw, k_Sb = jax.random.split(key, 5)

    # Deterministic parameter init (shapes from nn.Linear(n, m) / nn.Linear(m, m)).
    W_weight = jax.random.normal(k_Ww, (m, n), jnp.float32) * 0.1
    W_bias = jax.random.normal(k_Wb, (m,), jnp.float32) * 0.01
    S_weight = jax.random.normal(k_Sw, (m, m), jnp.float32) * 0.1
    S_bias = jax.random.normal(k_Sb, (m,), jnp.float32) * 0.01

    # Input y as (B, n, 1), matching the PyTorch forward's y.squeeze(2).
    y = jax.random.normal(k_y, (B, n, 1), jnp.float32)

    ref = lista_reference(y, W_weight, W_bias, S_weight, S_bias,
                          T=T, lambd=lambd, L=L)

    # f32-weight path: exact match to the reference.
    out = lista_forward(y, W_weight, W_bias, S_weight, S_bias,
                        T=T, lambd=lambd, L=L, weight_dtype=jnp.float32)
    out = jax.block_until_ready(out)
    assert out.shape == (B, m)
    assert jnp.allclose(out, ref, atol=1e-5, rtol=1e-5), "f32 mismatch vs reference"

    # bf16-weight path (fast MXU path on v6e/v7x): f32 accumulation, looser tol.
    out_bf16 = lista_forward(y, W_weight, W_bias, S_weight, S_bias,
                             T=T, lambd=lambd, L=L, weight_dtype=jnp.bfloat16)
    out_bf16 = jax.block_until_ready(out_bf16)
    assert out_bf16.shape == (B, m)
    assert jnp.allclose(out_bf16, ref, atol=5e-2, rtol=5e-2), "bf16 mismatch vs reference"

    print("KERNEL_OK")
</pallas_src>

<mosaic_0001>
module attributes {stable_mosaic.version = 11 : i64} {
  func.func @_lista_kernel(%arg0: i32, %arg1: memref<8x128xf32, #tpu.memory_space<vmem>>, %arg2: memref<128x128xf32, #tpu.memory_space<vmem>>, %arg3: memref<1x128xf32, #tpu.memory_space<vmem>>, %arg4: memref<128x128xf32, #tpu.memory_space<vmem>>, %arg5: memref<1x128xf32, #tpu.memory_space<vmem>>, %arg6: memref<8x128xf32, #tpu.memory_space<vmem>>) attributes {dimension_semantics = [#tpu.dimension_semantics<parallel>], iteration_bounds = array<i64: 1>, scalar_prefetch = 0 : i64, scratch_operands = 0 : i64, tpu.core_type = #tpu.core_type<tc>, window_params = [{transform_indices = @transform_0, window_bounds = array<i64: 8, 128>}, {pipeline_mode = #tpu.pipeline_mode<synchronous>, transform_indices = @transform_1, window_bounds = array<i64: 128, 128>}, {pipeline_mode = #tpu.pipeline_mode<synchronous>, transform_indices = @transform_2, window_bounds = array<i64: 1, 128>}, {pipeline_mode = #tpu.pipeline_mode<synchronous>, transform_indices = @transform_3, window_bounds = array<i64: 128, 128>}, {pipeline_mode = #tpu.pipeline_mode<synchronous>, transform_indices = @transform_4, window_bounds = array<i64: 1, 128>}, {transform_indices = @transform_5, window_bounds = array<i64: 8, 128>}]} {
    %c0 = arith.constant 0 : index
    %c0_0 = arith.constant 0 : index
    %0 = vector.load %arg1[%c0, %c0_0] : memref<8x128xf32, #tpu.memory_space<vmem>>, vector<8x128xf32>
    %c0_1 = arith.constant 0 : index
    %c0_2 = arith.constant 0 : index
    %1 = vector.load %arg2[%c0_1, %c0_2] : memref<128x128xf32, #tpu.memory_space<vmem>>, vector<128x128xf32>
    %c0_3 = arith.constant 0 : index
    %c0_4 = arith.constant 0 : index
    %2 = vector.load %arg4[%c0_3, %c0_4] : memref<128x128xf32, #tpu.memory_space<vmem>>, vector<128x128xf32>
    %c0_5 = arith.constant 0 : index
    %c0_6 = arith.constant 0 : index
    %3 = vector.load %arg3[%c0_5, %c0_6] : memref<1x128xf32, #tpu.memory_space<vmem>>, vector<1x128xf32>
    %c0_7 = arith.constant 0 : index
    %c0_8 = arith.constant 0 : index
    %4 = vector.load %arg5[%c0_7, %c0_8] : memref<1x128xf32, #tpu.memory_space<vmem>>, vector<1x128xf32>
    %cst = arith.constant dense<0.000000e+00> : vector<8x128xf32>
    %5 = tpu.matmul %0, %1, %cst {dimension_numbers = #tpu.dot_dimension_numbers<[1], [0], [0], [1], [0, 0, 1, 1], [], []>} : vector<8x128xf32>, vector<128x128xf32>, vector<8x128xf32> -> vector<8x128xf32>
    %6 = vector.broadcast %3 : vector<1x128xf32> to vector<8x128xf32>
    %7 = arith.addf %5, %6 : vector<8x128xf32>
    %cst_9 = arith.constant 4.750000e-02 : f32
    %8 = vector.broadcast %cst_9 : f32 to vector<8x128xf32>
    %9 = arith.subf %7, %8 : vector<8x128xf32>
    %cst_10 = arith.constant 0.000000e+00 : f32
    %10 = vector.broadcast %cst_10 : f32 to vector<8x128xf32>
    %11 = arith.maximumf %9, %10 : vector<8x128xf32>
    %cst_11 = arith.constant 0.000000e+00 : f32
    %12 = vector.broadcast %cst_11 : f32 to vector<8x128xf32>
    %13 = arith.subf %12, %7 : vector<8x128xf32>
    %cst_12 = arith.constant 4.750000e-02 : f32
    %14 = vector.broadcast %cst_12 : f32 to vector<8x128xf32>
    %15 = arith.subf %13, %14 : vector<8x128xf32>
    %cst_13 = arith.constant 0.000000e+00 : f32
    %16 = vector.broadcast %cst_13 : f32 to vector<8x128xf32>
    %17 = arith.maximumf %15, %16 : vector<8x128xf32>
    %18 = arith.subf %11, %17 : vector<8x128xf32>
    %19 = vector.broadcast %4 : vector<1x128xf32> to vector<8x128xf32>
    %20 = arith.addf %7, %19 : vector<8x128xf32>
    %c0_i32 = arith.constant 0 : i32
    %cst_14 = arith.constant dense<0.000000e+00> : vector<8x128xf32>
    %21 = tpu.matmul %18, %2, %cst_14 {dimension_numbers = #tpu.dot_dimension_numbers<[1], [0], [0], [1], [0, 0, 1, 1], [], []>} : vector<8x128xf32>, vector<128x128xf32>, vector<8x128xf32> -> vector<8x128xf32>
    %22 = arith.addf %20, %21 : vector<8x128xf32>
    %cst_15 = arith.constant 4.750000e-02 : f32
    %23 = vector.broadcast %cst_15 : f32 to vector<8x128xf32>
    %24 = arith.subf %22, %23 : vector<8x128xf32>
    %cst_16 = arith.constant 0.000000e+00 : f32
    %25 = vector.broadcast %cst_16 : f32 to vector<8x128xf32>
    %26 = arith.maximumf %24, %25 : vector<8x128xf32>
    %cst_17 = arith.constant 0.000000e+00 : f32
    %27 = vector.broadcast %cst_17 : f32 to vector<8x128xf32>
    %28 = arith.subf %27, %22 : vector<8x128xf32>
    %cst_18 = arith.constant 4.750000e-02 : f32
    %29 = vector.broadcast %cst_18 : f32 to vector<8x128xf32>
    %30 = arith.subf %28, %29 : vector<8x128xf32>
    %cst_19 = arith.constant 0.000000e+00 : f32
    %31 = vector.broadcast %cst_19 : f32 to vector<8x128xf32>
    %32 = arith.maximumf %30, %31 : vector<8x128xf32>
    %33 = arith.subf %26, %32 : vector<8x128xf32>
    %c1_i32 = arith.constant 1 : i32
    %cst_20 = arith.constant dense<0.000000e+00> : vector<8x128xf32>
    %34 = tpu.matmul %33, %2, %cst_20 {dimension_numbers = #tpu.dot_dimension_numbers<[1], [0], [0], [1], [0, 0, 1, 1], [], []>} : vector<8x128xf32>, vector<128x128xf32>, vector<8x128xf32> -> vector<8x128xf32>
    %35 = arith.addf %20, %34 : vector<8x128xf32>
    %cst_21 = arith.constant 4.750000e-02 : f32
    %36 = vector.broadcast %cst_21 : f32 to vector<8x128xf32>
    %37 = arith.subf %35, %36 : vector<8x128xf32>
    %cst_22 = arith.constant 0.000000e+00 : f32
    %38 = vector.broadcast %cst_22 : f32 to vector<8x128xf32>
    %39 = arith.maximumf %37, %38 : vector<8x128xf32>
    %cst_23 = arith.constant 0.000000e+00 : f32
    %40 = vector.broadcast %cst_23 : f32 to vector<8x128xf32>
    %41 = arith.subf %40, %35 : vector<8x128xf32>
    %cst_24 = arith.constant 4.750000e-02 : f32
    %42 = vector.broadcast %cst_24 : f32 to vector<8x128xf32>
    %43 = arith.subf %41, %42 : vector<8x128xf32>
    %cst_25 = arith.constant 0.000000e+00 : f32
    %44 = vector.broadcast %cst_25 : f32 to vector<8x128xf32>
    %45 = arith.maximumf %43, %44 : vector<8x128xf32>
    %46 = arith.subf %39, %45 : vector<8x128xf32>
    %c2_i32 = arith.constant 2 : i32
    %cst_26 = arith.constant dense<0.000000e+00> : vector<8x128xf32>
    %47 = tpu.matmul %46, %2, %cst_26 {dimension_numbers = #tpu.dot_dimension_numbers<[1], [0], [0], [1], [0, 0, 1, 1], [], []>} : vector<8x128xf32>, vector<128x128xf32>, vector<8x128xf32> -> vector<8x128xf32>
    %48 = arith.addf %20, %47 : vector<8x128xf32>
    %cst_27 = arith.constant 4.750000e-02 : f32
    %49 = vector.broadcast %cst_27 : f32 to vector<8x128xf32>
    %50 = arith.subf %48, %49 : vector<8x128xf32>
    %cst_28 = arith.constant 0.000000e+00 : f32
    %51 = vector.broadcast %cst_28 : f32 to vector<8x128xf32>
    %52 = arith.maximumf %50, %51 : vector<8x128xf32>
    %cst_29 = arith.constant 0.000000e+00 : f32
    %53 = vector.broadcast %cst_29 : f32 to vector<8x128xf32>
    %54 = arith.subf %53, %48 : vector<8x128xf32>
    %cst_30 = arith.constant 4.750000e-02 : f32
    %55 = vector.broadcast %cst_30 : f32 to vector<8x128xf32>
    %56 = arith.subf %54, %55 : vector<8x128xf32>
    %cst_31 = arith.constant 0.000000e+00 : f32
    %57 = vector.broadcast %cst_31 : f32 to vector<8x128xf32>
    %58 = arith.maximumf %56, %57 : vector<8x128xf32>
    %59 = arith.subf %52, %58 : vector<8x128xf32>
    %c3_i32 = arith.constant 3 : i32
    %cst_32 = arith.constant dense<0.000000e+00> : vector<8x128xf32>
    %60 = tpu.matmul %59, %2, %cst_32 {dimension_numbers = #tpu.dot_dimension_numbers<[1], [0], [0], [1], [0, 0, 1, 1], [], []>} : vector<8x128xf32>, vector<128x128xf32>, vector<8x128xf32> -> vector<8x128xf32>
    %61 = arith.addf %20, %60 : vector<8x128xf32>
    %cst_33 = arith.constant 4.750000e-02 : f32
    %62 = vector.broadcast %cst_33 : f32 to vector<8x128xf32>
    %63 = arith.subf %61, %62 : vector<8x128xf32>
    %cst_34 = arith.constant 0.000000e+00 : f32
    %64 = vector.broadcast %cst_34 : f32 to vector<8x128xf32>
    %65 = arith.maximumf %63, %64 : vector<8x128xf32>
    %cst_35 = arith.constant 0.000000e+00 : f32
    %66 = vector.broadcast %cst_35 : f32 to vector<8x128xf32>
    %67 = arith.subf %66, %61 : vector<8x128xf32>
    %cst_36 = arith.constant 4.750000e-02 : f32
    %68 = vector.broadcast %cst_36 : f32 to vector<8x128xf32>
    %69 = arith.subf %67, %68 : vector<8x128xf32>
    %cst_37 = arith.constant 0.000000e+00 : f32
    %70 = vector.broadcast %cst_37 : f32 to vector<8x128xf32>
    %71 = arith.maximumf %69, %70 : vector<8x128xf32>
    %72 = arith.subf %65, %71 : vector<8x128xf32>
    %c4_i32 = arith.constant 4 : i32
    %cst_38 = arith.constant dense<0.000000e+00> : vector<8x128xf32>
    %73 = tpu.matmul %72, %2, %cst_38 {dimension_numbers = #tpu.dot_dimension_numbers<[1], [0], [0], [1], [0, 0, 1, 1], [], []>} : vector<8x128xf32>, vector<128x128xf32>, vector<8x128xf32> -> vector<8x128xf32>
    %74 = arith.addf %20, %73 : vector<8x128xf32>
    %cst_39 = arith.constant 4.750000e-02 : f32
    %75 = vector.broadcast %cst_39 : f32 to vector<8x128xf32>
    %76 = arith.subf %74, %75 : vector<8x128xf32>
    %cst_40 = arith.constant 0.000000e+00 : f32
    %77 = vector.broadcast %cst_40 : f32 to vector<8x128xf32>
    %78 = arith.maximumf %76, %77 : vector<8x128xf32>
    %cst_41 = arith.constant 0.000000e+00 : f32
    %79 = vector.broadcast %cst_41 : f32 to vector<8x128xf32>
    %80 = arith.subf %79, %74 : vector<8x128xf32>
    %cst_42 = arith.constant 4.750000e-02 : f32
    %81 = vector.broadcast %cst_42 : f32 to vector<8x128xf32>
    %82 = arith.subf %80, %81 : vector<8x128xf32>
    %cst_43 = arith.constant 0.000000e+00 : f32
    %83 = vector.broadcast %cst_43 : f32 to vector<8x128xf32>
    %84 = arith.maximumf %82, %83 : vector<8x128xf32>
    %85 = arith.subf %78, %84 : vector<8x128xf32>
    %c0_44 = arith.constant 0 : index
    %c0_45 = arith.constant 0 : index
    %86 = vector.load %arg6[%c0_44, %c0_45] : memref<8x128xf32, #tpu.memory_space<vmem>>, vector<8x128xf32>
    tpu.vector_store %arg6[%c0_44, %c0_45], %85 {strides = array<i32>} : memref<8x128xf32, #tpu.memory_space<vmem>>, vector<8x128xf32>,
    return
  }
  func.func @transform_0(%arg0: i32) -> (i32, i32) {
    %c0_i32 = arith.constant 0 : i32
    %c0_i32_0 = arith.constant 0 : i32
    return %arg0, %c0_i32 : i32, i32
  }
  func.func @transform_1(%arg0: i32) -> (i32, i32) {
    %c0_i32 = arith.constant 0 : i32
    %c0_i32_0 = arith.constant 0 : i32
    %c0_i32_1 = arith.constant 0 : i32
    return %c0_i32, %c0_i32_0 : i32, i32
  }
  func.func @transform_2(%arg0: i32) -> (i32, i32) {
    %c0_i32 = arith.constant 0 : i32
    %c0_i32_0 = arith.constant 0 : i32
    %c0_i32_1 = arith.constant 0 : i32
    return %c0_i32, %c0_i32_0 : i32, i32
  }
  func.func @transform_3(%arg0: i32) -> (i32, i32) {
    %c0_i32 = arith.constant 0 : i32
    %c0_i32_0 = arith.constant 0 : i32
    %c0_i32_1 = arith.constant 0 : i32
    return %c0_i32, %c0_i32_0 : i32, i32
  }
  func.func @transform_4(%arg0: i32) -> (i32, i32) {
    %c0_i32 = arith.constant 0 : i32
    %c0_i32_0 = arith.constant 0 : i32
    %c0_i32_1 = arith.constant 0 : i32
    return %c0_i32, %c0_i32_0 : i32, i32
  }
  func.func @transform_5(%arg0: i32) -> (i32, i32) {
    %c0_i32 = arith.constant 0 : i32
    %c0_i32_0 = arith.constant 0 : i32
    return %arg0, %c0_i32 : i32, i32
  }
}

</mosaic_0001>

<llo_original>
// kernel: tpu_custom_call.1
$region0: #{tpu_custom_call.1}
  #allocation0 [shape = 'u32[]', space=smem, size = 0x4, offset = 0x4, fixed_abs, tag = 'smem constant byte address 0x4 - core index']
  #allocation1 [shape = 'u32[144,128]{1,0:T(1,128)}', space=vmem, size = 0x12000, scoped, tag = 'internal scratch']
  %s0 = inlined_call_operand.hbm [shape: f32[8,128], index: 0, kind: input, shape index: {}]
  %s1 = inlined_call_operand.hbm [shape: f32[128,128], index: 1, kind: input, shape index: {}]
  %s2 = inlined_call_operand.vmem [shape: f32[1,128], index: 2, kind: input, shape index: {}]
  %s3 = inlined_call_operand.hbm [shape: f32[128,128], index: 3, kind: input, shape index: {}]
  %s4 = inlined_call_operand.vmem [shape: f32[1,128], index: 4, kind: input, shape index: {}]
  %s5 = inlined_call_operand.hbm [shape: f32[8,128], index: 5, kind: output, shape index: {}]
  %s6 = sld [smem:[#allocation0]]
  $region42: #{tpu_custom_call.1} parent=0
    _
  %s8 = ssub.s32 1, %s6
  %s9 = scalar_select 0, %s8, %s6
  $region1: #{tpu_custom_call.1} parent=0
    #allocation2 [shape = 'u8[4096]{0}', space=vmem, size = 0x1000, scoped, tag = 'input window, operand 0, single buffered']
    #allocation3 [shape = 's32[1]{0}', space=sflag, size = 0x4, scoped, tag = 'scoped memory for tpu_custom_call.1']
    #allocation4 [shape = 's32[1]{0}', space=sflag, size = 0x4, scoped, tag = 'scoped memory for tpu_custom_call.1']
    #allocation5 [shape = 'u8[65536]{0}', space=vmem, size = 0x10000, scoped, tag = 'input window, operand 1, single buffered']
    #allocation6 [shape = 's32[1]{0}', space=sflag, size = 0x4, scoped, tag = 'scoped memory for tpu_custom_call.1']
    #allocation7 [shape = 'u8[65536]{0}', space=vmem, size = 0x10000, scoped, tag = 'input window, operand 3, single buffered']
    #allocation8 [shape = 'u8[4096]{0}', space=vmem, size = 0x1000, scoped, tag = 'output window, operand 0, single buffered']
    %10 = vsyncpa [#allocation3], 0
    %11 = vsyncpa [#allocation6], 0
    %12 = vsyncpa [#allocation4], 0
    // Predicated region
    $region2: #{tpu_custom_call.1} parent=1 // pred_check
      _
    $region3: #{tpu_custom_call.1} parent=1 // pred_check_branch
      %14 = sbr.rel (0) target = $region5
    $region4: #{tpu_custom_call.1} parent=1 // pred_region
      %s16 = ssub.s32 128, 128
      %17 = vsyncadd [#allocation3], %s16
      %s19 = sshll.u32 [#allocation2], 4
      %s20 = int_to_ptr.vmem [resolvable:$true] %s19
      %22 = dma.hbm_to_vmem [thread:$0]  %s0, 128, %s20, [#allocation3]
    $region5: #{tpu_custom_call.1} parent=1 // pred_fallthru
      _
    // Predicated region
    $region6: #{tpu_custom_call.1} parent=1 // pred_check
      _
    $region7: #{tpu_custom_call.1} parent=1 // pred_check_branch
      %24 = sbr.rel (0) target = $region9
    $region8: #{tpu_custom_call.1} parent=1 // pred_region
      %s26 = ssub.s32 2048, 2048
      %27 = vsyncadd [#allocation6], %s26
      %s28 = sshll.u32 [#allocation5], 4
      %s29 = int_to_ptr.vmem [resolvable:$true] %s28
      %34 = dma.hbm_to_vmem [thread:$0]  %s1, 2048, %s29, [#allocation6], 128, 128, 8
    $region9: #{tpu_custom_call.1} parent=1 // pred_fallthru
      _
    // Predicated region
    $region10: #{tpu_custom_call.1} parent=1 // pred_check
      _
    $region11: #{tpu_custom_call.1} parent=1 // pred_check_branch
      %36 = sbr.rel (0) target = $region13
    $region12: #{tpu_custom_call.1} parent=1 // pred_region
      _
    $region13: #{tpu_custom_call.1} parent=1 // pred_fallthru
      _
    // Predicated region
    $region14: #{tpu_custom_call.1} parent=1 // pred_check
      _
    $region15: #{tpu_custom_call.1} parent=1 // pred_check_branch
      %38 = sbr.rel (0) target = $region17
    $region16: #{tpu_custom_call.1} parent=1 // pred_region
      %s40 = ssub.s32 2048, 2048
      %41 = vsyncadd [#allocation6], %s40
      %s42 = sshll.u32 [#allocation7], 4
      %s43 = int_to_ptr.vmem [resolvable:$true] %s42
      %48 = dma.hbm_to_vmem [thread:$0]  %s3, 2048, %s43, [#allocation6], 128, 128, 8
    $region17: #{tpu_custom_call.1} parent=1 // pred_fallthru
      _
    // Predicated region
    $region18: #{tpu_custom_call.1} parent=1 // pred_check
      _
    $region19: #{tpu_custom_call.1} parent=1 // pred_check_branch
      %50 = sbr.rel (0) target = $region21
    $region20: #{tpu_custom_call.1} parent=1 // pred_region
      _
    $region21: #{tpu_custom_call.1} parent=1 // pred_fallthru
      _
    // Predicated region
    $region22: #{tpu_custom_call.1} parent=1 // pred_check
      _
    $region23: #{tpu_custom_call.1} parent=1 // pred_check_branch
      %52 = sbr.rel (0) target = $region25
    $region24: #{tpu_custom_call.1} parent=1 // pred_region
      %53 = dma.done [#allocation3], 128
    $region25: #{tpu_custom_call.1} parent=1 // pred_fallthru
      _
    // Predicated region
    $region26: #{tpu_custom_call.1} parent=1 // pred_check
      _
    $region27: #{tpu_custom_call.1} parent=1 // pred_check_branch
      %55 = sbr.rel (0) target = $region29
    $region28: #{tpu_custom_call.1} parent=1 // pred_region
      %56 = dma.done [#allocation6], 2048
    $region29: #{tpu_custom_call.1} parent=1 // pred_fallthru
      _
    // Predicated region
    $region30: #{tpu_custom_call.1} parent=1 // pred_check
      _
    $region31: #{tpu_custom_call.1} parent=1 // pred_check_branch
      %58 = sbr.rel (0) target = $region33
    $region32: #{tpu_custom_call.1} parent=1 // pred_region
      %59 = dma.done [#allocation6], 2048
    $region33: #{tpu_custom_call.1} parent=1 // pred_fallthru
      _
    %v60 = vld [vmem:[#allocation2] sm:$0xff]
    %v61 = vld [vmem:[#allocation5] sm:$0xff]
    %v62 = vld [vmem:[#allocation5 + $0x8] sm:$0xff]
    %v63 = vld [vmem:[#allocation5 + $0x10] sm:$0xff]
    %v64 = vld [vmem:[#allocation5 + $0x18] sm:$0xff]
    %v65 = vld [vmem:[#allocation5 + $0x20] sm:$0xff]
    %v66 = vld [vmem:[#allocation5 + $0x28] sm:$0xff]
    %v67 = vld [vmem:[#allocation5 + $0x30] sm:$0xff]
    %v68 = vld [vmem:[#allocation5 + $0x38] sm:$0xff]
    %v69 = vld [vmem:[#allocation5 + $0x40] sm:$0xff]
    %v70 = vld [vmem:[#allocation5 + $0x48] sm:$0xff]
    %v71 = vld [vmem:[#allocation5 + $0x50] sm:$0xff]
    %v72 = vld [vmem:[#allocation5 + $0x58] sm:$0xff]
    %v73 = vld [vmem:[#allocation5 + $0x60] sm:$0xff]
    %v74 = vld [vmem:[#allocation5 + $0x68] sm:$0xff]
    %v75 = vld [vmem:[#allocation5 + $0x70] sm:$0xff]
    %v76 = vld [vmem:[#allocation5 + $0x78] sm:$0xff]
    %v77 = vld [vmem:[#allocation7] sm:$0xff]
    %v78 = vld [vmem:[#allocation7 + $0x8] sm:$0xff]
    %v79 = vld [vmem:[#allocation7 + $0x10] sm:$0xff]
    %v80 = vld [vmem:[#allocation7 + $0x18] sm:$0xff]
    %v81 = vld [vmem:[#allocation7 + $0x20] sm:$0xff]
    %v82 = vld [vmem:[#allocation7 + $0x28] sm:$0xff]
    %v83 = vld [vmem:[#allocation7 + $0x30] sm:$0xff]
    %v84 = vld [vmem:[#allocation7 + $0x38] sm:$0xff]
    %v85 = vld [vmem:[#allocation7 + $0x40] sm:$0xff]
    %v86 = vld [vmem:[#allocation7 + $0x48] sm:$0xff]
    %v87 = vld [vmem:[#allocation7 + $0x50] sm:$0xff]
    %v88 = vld [vmem:[#allocation7 + $0x58] sm:$0xff]
    %v89 = vld [vmem:[#allocation7 + $0x60] sm:$0xff]
    %v90 = vld [vmem:[#allocation7 + $0x68] sm:$0xff]
    %v91 = vld [vmem:[#allocation7 + $0x70] sm:$0xff]
    %v92 = vld [vmem:[#allocation7 + $0x78] sm:$0xff]
    %v93 = vld [vmem:[%s2] sm:$0x1]
    %v94 = vld [vmem:[%s4] sm:$0x1]
    %v96 = vlaneseq
    %v97 = vshrl.u32 %v96, 7
    %v98 = vsub.s32 0, %v97
    %v99 = vrot.slane %v93, %v98
    %101 = vmatprep.subr.mxu0 0.0
    %102 = vmatpush1.msra.mxu0 %v61
    %103 = vmatprep.subr.mxu0 0.0
    %104 = vmatpush1.msra.mxu0 %v62
    %105 = vmatprep.subr.mxu0 0.0
    %106 = vmatpush1.msra.mxu0 %v63
    %107 = vmatprep.subr.mxu0 0.0
    %108 = vmatpush1.msra.mxu0 %v64
    %109 = vmatprep.subr.mxu0 0.0
    %110 = vmatpush1.msra.mxu0 %v65
    %111 = vmatprep.subr.mxu0 0.0
    %112 = vmatpush1.msra.mxu0 %v66
    %113 = vmatprep.subr.mxu0 0.0
    %114 = vmatpush1.msra.mxu0 %v67
    %115 = vmatprep.subr.mxu0 0.0
    %116 = vmatpush1.msra.mxu0 %v68
    %117 = vmatprep.subr.mxu0 0.0
    %118 = vmatpush1.msra.mxu0 %v69
    %119 = vmatprep.subr.mxu0 0.0
    %120 = vmatpush1.msra.mxu0 %v70
    %121 = vmatprep.subr.mxu0 0.0
    %122 = vmatpush1.msra.mxu0 %v71
    %123 = vmatprep.subr.mxu0 0.0
    %124 = vmatpush1.msra.mxu0 %v72
    %125 = vmatprep.subr.mxu0 0.0
    %126 = vmatpush1.msra.mxu0 %v73
    %127 = vmatprep.subr.mxu0 0.0
    %128 = vmatpush1.msra.mxu0 %v74
    %129 = vmatprep.subr.mxu0 0.0
    %130 = vmatpush1.msra.mxu0 %v75
    %131 = vmatprep.subr.mxu0 0.0
    %132 = vmatpush1.msra.mxu0 %v76
    %133 = vmatprep.subr.mxu0 0.0
    %134 = vmatpush1.msra.mxu0 0.0
    %135 = vmatprep.subr.mxu0 0.0
    %136 = vmatpush1.msra.mxu0 0.0
    %137 = vmatprep.subr.mxu0 0.0
    %138 = vmatpush1.msra.mxu0 0.0
    %139 = vmatprep.subr.mxu0 0.0
    %140 = vmatpush1.msra.mxu0 0.0
    %141 = vmatprep.subr.mxu0 0.0
    %142 = vmatpush1.msra.mxu0 0.0
    %143 = vmatprep.subr.mxu0 0.0
    %144 = vmatpush1.msra.mxu0 0.0
    %145 = vmatprep.subr.mxu0 0.0
    %146 = vmatpush1.msra.mxu0 0.0
    %147 = vmatprep.subr.mxu0 0.0
    %148 = vmatpush1.msra.mxu0 0.0
    %149 = vmatprep.subr.mxu0 0.0
    %150 = vmatpush1.msra.mxu0 0.0
    %151 = vmatprep.subr.mxu0 0.0
    %152 = vmatpush1.msra.mxu0 0.0
    %153 = vmatprep.subr.mxu0 0.0
    %154 = vmatpush1.msra.mxu0 0.0
    %155 = vmatprep.subr.mxu0 0.0
    %156 = vmatpush1.msra.mxu0 0.0
    %157 = vmatprep.subr.mxu0 0.0
    %158 = vmatpush1.msra.mxu0 0.0
    %159 = vmatprep.subr.mxu0 0.0
    %160 = vmatpush1.msra.mxu0 0.0
    %161 = vmatprep.subr.mxu0 0.0
    %162 = vmatpush1.msra.mxu0 0.0
    %163 = vmatprep.subr.mxu0 0.0
    %164 = vmatpush1.msra.mxu0 0.0
    %165 = vmatprep.mubr.f32.mxu0 0.0
    %166 = vmatmul.mubr.f32.gmra.mrb[0].mxu0 %v60
    %v167 = vpop.f32.mrb[0].mxu0
    %v168 = vadd.f32 %v99, %v167
    %v169 = vpop.f32.mrb[0].mxu0
    %170 = vdwg.mxu0
    %v171 = vsub.f32 %v168, 0.0475
    %v172 = vmax.f32 %v171, 0.0
    %v173 = vsub.f32 0.0, %v168
    %v174 = vsub.f32 %v173, 0.0475
    %v175 = vmax.f32 %v174, 0.0
    %v176 = vsub.f32 %v172, %v175
    %v178 = vlaneseq
    %v179 = vshrl.u32 %v178, 7
    %v180 = vsub.s32 0, %v179
    %v181 = vrot.slane %v94, %v180
    %v183 = vadd.f32 %v168, %v181
    %184 = vmatprep.subr.mxu0 0.0
    %185 = vmatpush1.msra.mxu0 %v77
    %186 = vmatprep.subr.mxu0 0.0
    %187 = vmatpush1.msra.mxu0 %v78
    %188 = vmatprep.subr.mxu0 0.0
    %189 = vmatpush1.msra.mxu0 %v79
    %190 = vmatprep.subr.mxu0 0.0
    %191 = vmatpush1.msra.mxu0 %v80
    %192 = vmatprep.subr.mxu0 0.0
    %193 = vmatpush1.msra.mxu0 %v81
    %194 = vmatprep.subr.mxu0 0.0
    %195 = vmatpush1.msra.mxu0 %v82
    %196 = vmatprep.subr.mxu0 0.0
    %197 = vmatpush1.msra.mxu0 %v83
    %198 = vmatprep.subr.mxu0 0.0
    %199 = vmatpush1.msra.mxu0 %v84
    %200 = vmatprep.subr.mxu0 0.0
    %201 = vmatpush1.msra.mxu0 %v85
    %202 = vmatprep.subr.mxu0 0.0
    %203 = vmatpush1.msra.mxu0 %v86
    %204 = vmatprep.subr.mxu0 0.0
    %205 = vmatpush1.msra.mxu0 %v87
    %206 = vmatprep.subr.mxu0 0.0
    %207 = vmatpush1.msra.mxu0 %v88
    %208 = vmatprep.subr.mxu0 0.0
    %209 = vmatpush1.msra.mxu0 %v89
    %210 = vmatprep.subr.mxu0 0.0
    %211 = vmatpush1.msra.mxu0 %v90
    %212 = vmatprep.subr.mxu0 0.0
    %213 = vmatpush1.msra.mxu0 %v91
    %214 = vmatprep.subr.mxu0 0.0
    %215 = vmatpush1.msra.mxu0 %v92
    %216 = vmatprep.subr.mxu0 0.0
    %217 = vmatpush1.msra.mxu0 0.0
    %218 = vmatprep.subr.mxu0 0.0
    %219 = vmatpush1.msra.mxu0 0.0
    %220 = vmatprep.subr.mxu0 0.0
    %221 = vmatpush1.msra.mxu0 0.0
    %222 = vmatprep.subr.mxu0 0.0
    %223 = vmatpush1.msra.mxu0 0.0
    %224 = vmatprep.subr.mxu0 0.0
    %225 = vmatpush1.msra.mxu0 0.0
    %226 = vmatprep.subr.mxu0 0.0
    %227 = vmatpush1.msra.mxu0 0.0
    %228 = vmatprep.subr.mxu0 0.0
    %229 = vmatpush1.msra.mxu0 0.0
    %230 = vmatprep.subr.mxu0 0.0
    %231 = vmatpush1.msra.mxu0 0.0
    %232 = vmatprep.subr.mxu0 0.0
    %233 = vmatpush1.msra.mxu0 0.0
    %234 = vmatprep.subr.mxu0 0.0
    %235 = vmatpush1.msra.mxu0 0.0
    %236 = vmatprep.subr.mxu0 0.0
    %237 = vmatpush1.msra.mxu0 0.0
    %238 = vmatprep.subr.mxu0 0.0
    %239 = vmatpush1.msra.mxu0 0.0
    %240 = vmatprep.subr.mxu0 0.0
    %241 = vmatpush1.msra.mxu0 0.0
    %242 = vmatprep.subr.mxu0 0.0
    %243 = vmatpush1.msra.mxu0 0.0
    %244 = vmatprep.subr.mxu0 0.0
    %245 = vmatpush1.msra.mxu0 0.0
    %246 = vmatprep.subr.mxu0 0.0
    %247 = vmatpush1.msra.mxu0 0.0
    %248 = vmatprep.mubr.f32.mxu0 0.0
    %249 = vmatmul.mubr.f32.gmra.mrb[0].mxu0 %v176
    %v250 = vpop.f32.mrb[0].mxu0
    %v251 = vadd.f32 0.0, %v250
    %v252 = vpop.f32.mrb[0].mxu0
    %253 = vdwg.mxu0
    %v254 = vadd.f32 %v183, %v251
    %v255 = vsub.f32 %v254, 0.0475
    %v256 = vmax.f32 %v255, 0.0
    %v257 = vsub.f32 0.0, %v254
    %v258 = vsub.f32 %v257, 0.0475
    %v259 = vmax.f32 %v258, 0.0
    %v260 = vsub.f32 %v256, %v259
    %261 = vmatprep.subr.mxu0 0.0
    %262 = vmatpush1.msra.mxu0 %v77
    %263 = vmatprep.subr.mxu0 0.0
    %264 = vmatpush1.msra.mxu0 %v78
    %265 = vmatprep.subr.mxu0 0.0
    %266 = vmatpush1.msra.mxu0 %v79
    %267 = vmatprep.subr.mxu0 0.0
    %268 = vmatpush1.msra.mxu0 %v80
    %269 = vmatprep.subr.mxu0 0.0
    %270 = vmatpush1.msra.mxu0 %v81
    %271 = vmatprep.subr.mxu0 0.0
    %272 = vmatpush1.msra.mxu0 %v82
    %273 = vmatprep.subr.mxu0 0.0
    %274 = vmatpush1.msra.mxu0 %v83
    %275 = vmatprep.subr.mxu0 0.0
    %276 = vmatpush1.msra.mxu0 %v84
    %277 = vmatprep.subr.mxu0 0.0
    %278 = vmatpush1.msra.mxu0 %v85
    %279 = vmatprep.subr.mxu0 0.0
    %280 = vmatpush1.msra.mxu0 %v86
    %281 = vmatprep.subr.mxu0 0.0
    %282 = vmatpush1.msra.mxu0 %v87
    %283 = vmatprep.subr.mxu0 0.0
    %284 = vmatpush1.msra.mxu0 %v88
    %285 = vmatprep.subr.mxu0 0.0
    %286 = vmatpush1.msra.mxu0 %v89
    %287 = vmatprep.subr.mxu0 0.0
    %288 = vmatpush1.msra.mxu0 %v90
    %289 = vmatprep.subr.mxu0 0.0
    %290 = vmatpush1.msra.mxu0 %v91
    %291 = vmatprep.subr.mxu0 0.0
    %292 = vmatpush1.msra.mxu0 %v92
    %293 = vmatprep.subr.mxu0 0.0
    %294 = vmatpush1.msra.mxu0 0.0
    %295 = vmatprep.subr.mxu0 0.0
    %296 = vmatpush1.msra.mxu0 0.0
    %297 = vmatprep.subr.mxu0 0.0
    %298 = vmatpush1.msra.mxu0 0.0
    %299 = vmatprep.subr.mxu0 0.0
    %300 = vmatpush1.msra.mxu0 0.0
    %301 = vmatprep.subr.mxu0 0.0
    %302 = vmatpush1.msra.mxu0 0.0
    %303 = vmatprep.subr.mxu0 0.0
    %304 = vmatpush1.msra.mxu0 0.0
    %305 = vmatprep.subr.mxu0 0.0
    %306 = vmatpush1.msra.mxu0 0.0
    %307 = vmatprep.subr.mxu0 0.0
    %308 = vmatpush1.msra.mxu0 0.0
    %309 = vmatprep.subr.mxu0 0.0
    %310 = vmatpush1.msra.mxu0 0.0
    %311 = vmatprep.subr.mxu0 0.0
    %312 = vmatpush1.msra.mxu0 0.0
    %313 = vmatprep.subr.mxu0 0.0
    %314 = vmatpush1.msra.mxu0 0.0
    %315 = vmatprep.subr.mxu0 0.0
    %316 = vmatpush1.msra.mxu0 0.0
    %317 = vmatprep.subr.mxu0 0.0
    %318 = vmatpush1.msra.mxu0 0.0
    %319 = vmatprep.subr.mxu0 0.0
    %320 = vmatpush1.msra.mxu0 0.0
    %321 = vmatprep.subr.mxu0 0.0
    %322 = vmatpush1.msra.mxu0 0.0
    %323 = vmatprep.subr.mxu0 0.0
    %324 = vmatpush1.msra.mxu0 0.0
    %325 = vmatprep.mubr.f32.mxu0 0.0
    %326 = vmatmul.mubr.f32.gmra.mrb[0].mxu0 %v260
    %v327 = vpop.f32.mrb[0].mxu0
    %v328 = vadd.f32 0.0, %v327
    %v329 = vpop.f32.mrb[0].mxu0
    %330 = vdwg.mxu0
    %v331 = vadd.f32 %v183, %v328
    %v332 = vsub.f32 %v331, 0.0475
    %v333 = vmax.f32 %v332, 0.0
    %v334 = vsub.f32 0.0, %v331
    %v335 = vsub.f32 %v334, 0.0475
    %v336 = vmax.f32 %v335, 0.0
    %v337 = vsub.f32 %v333, %v336
    %338 = vmatprep.subr.mxu0 0.0
    %339 = vmatpush1.msra.mxu0 %v77
    %340 = vmatprep.subr.mxu0 0.0
    %341 = vmatpush1.msra.mxu0 %v78
    %342 = vmatprep.subr.mxu0 0.0
    %343 = vmatpush1.msra.mxu0 %v79
    %344 = vmatprep.subr.mxu0 0.0
    %345 = vmatpush1.msra.mxu0 %v80
    %346 = vmatprep.subr.mxu0 0.0
    %347 = vmatpush1.msra.mxu0 %v81
    %348 = vmatprep.subr.mxu0 0.0
    %349 = vmatpush1.msra.mxu0 %v82
    %350 = vmatprep.subr.mxu0 0.0
    %351 = vmatpush1.msra.mxu0 %v83
    %352 = vmatprep.subr.mxu0 0.0
    %353 = vmatpush1.msra.mxu0 %v84
    %354 = vmatprep.subr.mxu0 0.0
    %355 = vmatpush1.msra.mxu0 %v85
    %356 = vmatprep.subr.mxu0 0.0
    %357 = vmatpush1.msra.mxu0 %v86
    %358 = vmatprep.subr.mxu0 0.0
    %359 = vmatpush1.msra.mxu0 %v87
    %360 = vmatprep.subr.mxu0 0.0
    %361 = vmatpush1.msra.mxu0 %v88
    %362 = vmatprep.subr.mxu0 0.0
    %363 = vmatpush1.msra.mxu0 %v89
    %364 = vmatprep.subr.mxu0 0.0
    %365 = vmatpush1.msra.mxu0 %v90
    %366 = vmatprep.subr.mxu0 0.0
    %367 = vmatpush1.msra.mxu0 %v91
    %368 = vmatprep.subr.mxu0 0.0
    %369 = vmatpush1.msra.mxu0 %v92
    %370 = vmatprep.subr.mxu0 0.0
    %371 = vmatpush1.msra.mxu0 0.0
    %372 = vmatprep.subr.mxu0 0.0
    %373 = vmatpush1.msra.mxu0 0.0
    %374 = vmatprep.subr.mxu0 0.0
    %375 = vmatpush1.msra.mxu0 0.0
    %376 = vmatprep.subr.mxu0 0.0
    %377 = vmatpush1.msra.mxu0 0.0
    %378 = vmatprep.subr.mxu0 0.0
    %379 = vmatpush1.msra.mxu0 0.0
    %380 = vmatprep.subr.mxu0 0.0
    %381 = vmatpush1.msra.mxu0 0.0
    %382 = vmatprep.subr.mxu0 0.0
    %383 = vmatpush1.msra.mxu0 0.0
    %384 = vmatprep.subr.mxu0 0.0
    %385 = vmatpush1.msra.mxu0 0.0
    %386 = vmatprep.subr.mxu0 0.0
    %387 = vmatpush1.msra.mxu0 0.0
    %388 = vmatprep.subr.mxu0 0.0
    %389 = vmatpush1.msra.mxu0 0.0
    %390 = vmatprep.subr.mxu0 0.0
    %391 = vmatpush1.msra.mxu0 0.0
    %392 = vmatprep.subr.mxu0 0.0
    %393 = vmatpush1.msra.mxu0 0.0
    %394 = vmatprep.subr.mxu0 0.0
    %395 = vmatpush1.msra.mxu0 0.0
    %396 = vmatprep.subr.mxu0 0.0
    %397 = vmatpush1.msra.mxu0 0.0
    %398 = vmatprep.subr.mxu0 0.0
    %399 = vmatpush1.msra.mxu0 0.0
    %400 = vmatprep.subr.mxu0 0.0
    %401 = vmatpush1.msra.mxu0 0.0
    %402 = vmatprep.mubr.f32.mxu0 0.0
    %403 = vmatmul.mubr.f32.gmra.mrb[0].mxu0 %v337
    %v404 = vpop.f32.mrb[0].mxu0
    %v405 = vadd.f32 0.0, %v404
    %v406 = vpop.f32.mrb[0].mxu0
    %407 = vdwg.mxu0
    %v408 = vadd.f32 %v183, %v405
    %v409 = vsub.f32 %v408, 0.0475
    %v410 = vmax.f32 %v409, 0.0
    %v411 = vsub.f32 0.0, %v408
    %v412 = vsub.f32 %v411, 0.0475
    %v413 = vmax.f32 %v412, 0.0
    %v414 = vsub.f32 %v410, %v413
    %415 = vmatprep.subr.mxu0 0.0
    %416 = vmatpush1.msra.mxu0 %v77
    %417 = vmatprep.subr.mxu0 0.0
    %418 = vmatpush1.msra.mxu0 %v78
    %419 = vmatprep.subr.mxu0 0.0
    %420 = vmatpush1.msra.mxu0 %v79
    %421 = vmatprep.subr.mxu0 0.0
    %422 = vmatpush1.msra.mxu0 %v80
    %423 = vmatprep.subr.mxu0 0.0
    %424 = vmatpush1.msra.mxu0 %v81
    %425 = vmatprep.subr.mxu0 0.0
    %426 = vmatpush1.msra.mxu0 %v82
    %427 = vmatprep.subr.mxu0 0.0
    %428 = vmatpush1.msra.mxu0 %v83
    %429 = vmatprep.subr.mxu0 0.0
    %430 = vmatpush1.msra.mxu0 %v84
    %431 = vmatprep.subr.mxu0 0.0
    %432 = vmatpush1.msra.mxu0 %v85
    %433 = vmatprep.subr.mxu0 0.0
    %434 = vmatpush1.msra.mxu0 %v86
    %435 = vmatprep.subr.mxu0 0.0
    %436 = vmatpush1.msra.mxu0 %v87
    %437 = vmatprep.subr.mxu0 0.0
    %438 = vmatpush1.msra.mxu0 %v88
    %439 = vmatprep.subr.mxu0 0.0
    %440 = vmatpush1.msra.mxu0 %v89
    %441 = vmatprep.subr.mxu0 0.0
    %442 = vmatpush1.msra.mxu0 %v90
    %443 = vmatprep.subr.mxu0 0.0
    %444 = vmatpush1.msra.mxu0 %v91
    %445 = vmatprep.subr.mxu0 0.0
    %446 = vmatpush1.msra.mxu0 %v92
    %447 = vmatprep.subr.mxu0 0.0
    %448 = vmatpush1.msra.mxu0 0.0
    %449 = vmatprep.subr.mxu0 0.0
    %450 = vmatpush1.msra.mxu0 0.0
    %451 = vmatprep.subr.mxu0 0.0
    %452 = vmatpush1.msra.mxu0 0.0
    %453 = vmatprep.subr.mxu0 0.0
    %454 = vmatpush1.msra.mxu0 0.0
    %455 = vmatprep.subr.mxu0 0.0
    %456 = vmatpush1.msra.mxu0 0.0
    %457 = vmatprep.subr.mxu0 0.0
    %458 = vmatpush1.msra.mxu0 0.0
    %459 = vmatprep.subr.mxu0 0.0
    %460 = vmatpush1.msra.mxu0 0.0
    %461 = vmatprep.subr.mxu0 0.0
    %462 = vmatpush1.msra.mxu0 0.0
    %463 = vmatprep.subr.mxu0 0.0
    %464 = vmatpush1.msra.mxu0 0.0
    %465 = vmatprep.subr.mxu0 0.0
    %466 = vmatpush1.msra.mxu0 0.0
    %467 = vmatprep.subr.mxu0 0.0
    %468 = vmatpush1.msra.mxu0 0.0
    %469 = vmatprep.subr.mxu0 0.0
    %470 = vmatpush1.msra.mxu0 0.0
    %471 = vmatprep.subr.mxu0 0.0
    %472 = vmatpush1.msra.mxu0 0.0
    %473 = vmatprep.subr.mxu0 0.0
    %474 = vmatpush1.msra.mxu0 0.0
    %475 = vmatprep.subr.mxu0 0.0
    %476 = vmatpush1.msra.mxu0 0.0
    %477 = vmatprep.subr.mxu0 0.0
    %478 = vmatpush1.msra.mxu0 0.0
    %479 = vmatprep.mubr.f32.mxu0 0.0
    %480 = vmatmul.mubr.f32.gmra.mrb[0].mxu0 %v414
    %v481 = vpop.f32.mrb[0].mxu0
    %v482 = vadd.f32 0.0, %v481
    %v483 = vpop.f32.mrb[0].mxu0
    %484 = vdwg.mxu0
    %v485 = vadd.f32 %v183, %v482
    %v486 = vsub.f32 %v485, 0.0475
    %v487 = vmax.f32 %v486, 0.0
    %v488 = vsub.f32 0.0, %v485
    %v489 = vsub.f32 %v488, 0.0475
    %v490 = vmax.f32 %v489, 0.0
    %v491 = vsub.f32 %v487, %v490
    %492 = vmatprep.subr.mxu0 0.0
    %493 = vmatpush1.msra.mxu0 %v77
    %494 = vmatprep.subr.mxu0 0.0
    %495 = vmatpush1.msra.mxu0 %v78
    %496 = vmatprep.subr.mxu0 0.0
    %497 = vmatpush1.msra.mxu0 %v79
    %498 = vmatprep.subr.mxu0 0.0
    %499 = vmatpush1.msra.mxu0 %v80
    %500 = vmatprep.subr.mxu0 0.0
    %501 = vmatpush1.msra.mxu0 %v81
    %502 = vmatprep.subr.mxu0 0.0
    %503 = vmatpush1.msra.mxu0 %v82
    %504 = vmatprep.subr.mxu0 0.0
    %505 = vmatpush1.msra.mxu0 %v83
    %506 = vmatprep.subr.mxu0 0.0
    %507 = vmatpush1.msra.mxu0 %v84
    %508 = vmatprep.subr.mxu0 0.0
    %509 = vmatpush1.msra.mxu0 %v85
    %510 = vmatprep.subr.mxu0 0.0
    %511 = vmatpush1.msra.mxu0 %v86
    %512 = vmatprep.subr.mxu0 0.0
    %513 = vmatpush1.msra.mxu0 %v87
    %514 = vmatprep.subr.mxu0 0.0
    %515 = vmatpush1.msra.mxu0 %v88
    %516 = vmatprep.subr.mxu0 0.0
    %517 = vmatpush1.msra.mxu0 %v89
    %518 = vmatprep.subr.mxu0 0.0
    %519 = vmatpush1.msra.mxu0 %v90
    %520 = vmatprep.subr.mxu0 0.0
    %521 = vmatpush1.msra.mxu0 %v91
    %522 = vmatprep.subr.mxu0 0.0
    %523 = vmatpush1.msra.mxu0 %v92
    %524 = vmatprep.subr.mxu0 0.0
    %525 = vmatpush1.msra.mxu0 0.0
    %526 = vmatprep.subr.mxu0 0.0
    %527 = vmatpush1.msra.mxu0 0.0
    %528 = vmatprep.subr.mxu0 0.0
    %529 = vmatpush1.msra.mxu0 0.0
    %530 = vmatprep.subr.mxu0 0.0
    %531 = vmatpush1.msra.mxu0 0.0
    %532 = vmatprep.subr.mxu0 0.0
    %533 = vmatpush1.msra.mxu0 0.0
    %534 = vmatprep.subr.mxu0 0.0
    %535 = vmatpush1.msra.mxu0 0.0
    %536 = vmatprep.subr.mxu0 0.0
    %537 = vmatpush1.msra.mxu0 0.0
    %538 = vmatprep.subr.mxu0 0.0
    %539 = vmatpush1.msra.mxu0 0.0
    %540 = vmatprep.subr.mxu0 0.0
    %541 = vmatpush1.msra.mxu0 0.0
    %542 = vmatprep.subr.mxu0 0.0
    %543 = vmatpush1.msra.mxu0 0.0
    %544 = vmatprep.subr.mxu0 0.0
    %545 = vmatpush1.msra.mxu0 0.0
    %546 = vmatprep.subr.mxu0 0.0
    %547 = vmatpush1.msra.mxu0 0.0
    %548 = vmatprep.subr.mxu0 0.0
    %549 = vmatpush1.msra.mxu0 0.0
    %550 = vmatprep.subr.mxu0 0.0
    %551 = vmatpush1.msra.mxu0 0.0
    %552 = vmatprep.subr.mxu0 0.0
    %553 = vmatpush1.msra.mxu0 0.0
    %554 = vmatprep.subr.mxu0 0.0
    %555 = vmatpush1.msra.mxu0 0.0
    %556 = vmatprep.mubr.f32.mxu0 0.0
    %557 = vmatmul.mubr.f32.gmra.mrb[0].mxu0 %v491
    %v558 = vpop.f32.mrb[0].mxu0
    %v559 = vadd.f32 0.0, %v558
    %v560 = vpop.f32.mrb[0].mxu0
    %561 = vdwg.mxu0
    %v562 = vadd.f32 %v183, %v559
    %v563 = vsub.f32 %v562, 0.0475
    %v564 = vmax.f32 %v563, 0.0
    %v565 = vsub.f32 0.0, %v562
    %v566 = vsub.f32 %v565, 0.0475
    %v567 = vmax.f32 %v566, 0.0
    %v568 = vsub.f32 %v564, %v567
    %569 = vst [vmem:[#allocation8] sm:$0xff] %v568
    // Predicated region
    $region34: #{tpu_custom_call.1} parent=1 // pred_check
      _
    $region35: #{tpu_custom_call.1} parent=1 // pred_check_branch
      %571 = sbr.rel (0) target = $region37
    $region36: #{tpu_custom_call.1} parent=1 // pred_region
      %s573 = ssub.s32 128, 128
      %574 = vsyncadd [#allocation4], %s573
      %s576 = sshll.u32 [#allocation8], 4
      %s577 = int_to_ptr.vmem [resolvable:$true] %s576
      %579 = dma.vmem_to_hbm [thread:$0]  %s577, 128, %s5, [#allocation4]
    $region37: #{tpu_custom_call.1} parent=1 // pred_fallthru
      _
    // Predicated region
    $region38: #{tpu_custom_call.1} parent=1 // pred_check
      _
    $region39: #{tpu_custom_call.1} parent=1 // pred_check_branch
      %581 = sbr.rel (0) target = $region41
    $region40: #{tpu_custom_call.1} parent=1 // pred_region
      %582 = dma.done [#allocation4], 128
    $region41: #{tpu_custom_call.1} parent=1 // pred_fallthru
      _
    %583 = vsyncpa [#allocation3], 1
    %584 = vsyncpa [#allocation6], 1
    %585 = vsyncpa [#allocation4], 1

</llo_original>
